<compile_context>
chip_gen: v7x
topology: tpu7x:2x2x1
jax: 0.10.0
libtpu: 0.0.40
codegen_flags: <defaults>
</compile_context>

<pallas_src>
import functools

import jax
import jax.numpy as jnp
from jax import lax
from jax.experimental import pallas as pl
from jax.experimental.pallas import tpu as pltpu


def _round_up(x, m):
    return ((x + m - 1) // m) * m


def _sublane(dtype):
    """Minimum sublane multiple for the second-minor dim of a tile."""
    return max(8, 32 // jnp.dtype(dtype).itemsize)   # f32->8, bf16->16, i8->32


@functools.lru_cache(maxsize=1)
def _vmem_limit_bytes():
    """Per-core VMEM limit: 3/4 of reported capacity, conservative fallback."""
    phys = 64 * 1024 * 1024                 # v7x per-TC physical (safe floor)
    try:
        info = pltpu.get_tpu_info()
        cap = getattr(info, "vmem_capacity_bytes", None)
        if cap:
            phys = int(cap)
    except Exception:
        pass
    return int(min(phys * 3 // 4, 100 * 1024 * 1024))


def _linear_kernel(x_ref, w_ref, b_ref, o_ref):
    # x_ref: (bt, dim)   input rows
    # w_ref: (tn, dim)   weight tile; contracted on its last axis (no transpose)
    # b_ref: (1, tn)     bias tile
    # o_ref: (bt, tn)    lane-dense output tile (tn is a multiple of 128)
    acc = lax.dot_general(
        x_ref[...], w_ref[...],
        dimension_numbers=(((1,), (1,)), ((), ())),
        preferred_element_type=jnp.float32,
    )
    o_ref[...] = (acc + b_ref[...]).astype(o_ref.dtype)


@functools.partial(jax.jit, static_argnames=("block_batch",))
def classif_lin_forward(X, weight, bias, *, block_batch=1024):
    """X: (..., dim) -> (..., nb_classes), matching nn.Linear(dim, nb_classes)."""
    *lead, dim = X.shape
    nb_classes = weight.shape[0]

    x2 = X.reshape(-1, dim)
    batch = x2.shape[0]

    x_bytes = jnp.dtype(X.dtype).itemsize
    w_bytes = jnp.dtype(weight.dtype).itemsize
    b_bytes = jnp.dtype(bias.dtype).itemsize
    o_bytes = x_bytes
    sub = _sublane(X.dtype)

    # ---- lane-dense class axis: pad N up to a multiple of 128 --------------
    n_pad = _round_up(nb_classes, 128)
    w_p = jnp.pad(weight, ((0, n_pad - nb_classes), (0, 0)))      # (n_pad, dim)
    b_p = jnp.pad(bias, (0, n_pad - nb_classes)).reshape(1, n_pad)

    # ---- VMEM-aware tile selection ------------------------------------------
    vmem_limit = _vmem_limit_bytes()
    budget = vmem_limit * 85 // 100          # headroom for internal scratch

    # Class tile: largest multiple of 128 whose double-buffered weight block
    # takes at most ~half the budget (leaves room for the X / out tiles).
    tn_cap = max(128, (budget // 2) // max(2 * w_bytes * dim, 1) // 128 * 128)
    tn = min(n_pad, tn_cap)
    # TODO(synk): if even tn=128 over-fills VMEM (enormous `dim`), a K grid
    # axis with an f32 accumulator would be needed; dim is not tiled here.

    fixed = 2 * w_bytes * dim * tn + 2 * b_bytes * tn              # W + bias bufs
    per_row = 2 * x_bytes * dim + 2 * o_bytes * tn                 # X + out bufs
    bt_max = max(sub, (max(budget - fixed, 0) // max(per_row, 1)) // sub * sub)

    bt = min(block_batch, bt_max, _round_up(batch, sub))
    bt = max(sub, bt // sub * sub)

    # Megacore: give the two v7x TensorCores >= 2 steps each when batch allows.
    min_steps = 4
    if batch >= min_steps * sub and pl.cdiv(batch, bt) < min_steps:
        bt = max(sub, _round_up(pl.cdiv(batch, min_steps), sub))

    nbt = pl.cdiv(batch, bt)
    nct = pl.cdiv(n_pad, tn)

    cost = pl.CostEstimate(
        flops=2 * batch * dim * n_pad,
        bytes_accessed=(x_bytes * batch * dim + w_bytes * dim * n_pad
                        + b_bytes * n_pad + o_bytes * batch * n_pad),
        transcendentals=0,
    )

    out = pl.pallas_call(
        _linear_kernel,
        out_shape=jax.ShapeDtypeStruct((batch, n_pad), X.dtype),
        grid_spec=pltpu.PrefetchScalarGridSpec(
            num_scalar_prefetch=0,
            # class tiles outer / batch tiles inner: each weight tile stays
            # resident in VMEM across all batch steps (read once from HBM).
            grid=(nct, nbt),
            in_specs=[
                pl.BlockSpec((bt, dim), lambda j, i: (i, 0)),     # X rows
                pl.BlockSpec((tn, dim), lambda j, i: (j, 0)),     # weight tile
                pl.BlockSpec((1, tn), lambda j, i: (0, j)),       # bias tile
            ],
            out_specs=pl.BlockSpec((bt, tn), lambda j, i: (i, j)),
        ),
        compiler_params=pltpu.CompilerParams(
            dimension_semantics=("parallel", "parallel"),
            vmem_limit_bytes=int(vmem_limit),
        ),
        cost_estimate=cost,
    )(x2, w_p, b_p)

    return out[:, :nb_classes].reshape(*lead, nb_classes)


def _reference(X, weight, bias):
    """Pure-JAX transcription of the PyTorch forward, for verification."""
    return jnp.matmul(X, weight.T) + bias


if __name__ == "__main__":
    batch, dim, nb_classes = 16, 32, 4

    key = jax.random.PRNGKey(0)
    kx, kw, kb = jax.random.split(key, 3)

    # Deterministic params mirroring nn.Linear(dim, nb_classes) shapes/init scale.
    bound = 1.0 / (dim ** 0.5)
    weight = jax.random.uniform(kw, (nb_classes, dim), jnp.float32, -bound, bound)
    bias = jax.random.uniform(kb, (nb_classes,), jnp.float32, -bound, bound)

    X = jax.random.normal(kx, (batch, dim), dtype=jnp.float32)

    out = classif_lin_forward(X, weight, bias)
    out = jax.block_until_ready(out)

    ref = _reference(X, weight, bias)
    assert out.shape == (batch, nb_classes)
    assert jnp.allclose(out, ref, atol=1e-5, rtol=1e-5), (out, ref)

    print("KERNEL_OK")
</pallas_src>

<mosaic_0001>
module attributes {stable_mosaic.version = 11 : i64} {
  func.func @_linear_kernel(%arg0: i32, %arg1: i32, %arg2: memref<16x32xf32, #tpu.memory_space<vmem>>, %arg3: memref<128x32xf32, #tpu.memory_space<vmem>>, %arg4: memref<1x128xf32, #tpu.memory_space<vmem>>, %arg5: memref<16x128xf32, #tpu.memory_space<vmem>>) attributes {dimension_semantics = [#tpu.dimension_semantics<parallel>, #tpu.dimension_semantics<parallel>], iteration_bounds = array<i64: 1, 1>, scalar_prefetch = 0 : i64, scratch_operands = 0 : i64, tpu.core_type = #tpu.core_type<tc>, window_params = [{transform_indices = @transform_0, window_bounds = array<i64: 16, 32>}, {transform_indices = @transform_1, window_bounds = array<i64: 128, 32>}, {transform_indices = @transform_2, window_bounds = array<i64: 1, 128>}, {transform_indices = @transform_3, window_bounds = array<i64: 16, 128>}]} {
    %c0 = arith.constant 0 : index
    %c0_0 = arith.constant 0 : index
    %0 = vector.load %arg2[%c0, %c0_0] : memref<16x32xf32, #tpu.memory_space<vmem>>, vector<16x32xf32>
    %c0_1 = arith.constant 0 : index
    %c0_2 = arith.constant 0 : index
    %1 = vector.load %arg3[%c0_1, %c0_2] : memref<128x32xf32, #tpu.memory_space<vmem>>, vector<128x32xf32>
    %cst = arith.constant dense<0.000000e+00> : vector<16x128xf32>
    %2 = tpu.matmul %0, %1, %cst {dimension_numbers = #tpu.dot_dimension_numbers<[1], [1], [0], [0], [0, 0, 1, 0], [], []>} : vector<16x32xf32>, vector<128x32xf32>, vector<16x128xf32> -> vector<16x128xf32>
    %c0_3 = arith.constant 0 : index
    %c0_4 = arith.constant 0 : index
    %3 = vector.load %arg4[%c0_3, %c0_4] : memref<1x128xf32, #tpu.memory_space<vmem>>, vector<1x128xf32>
    %4 = vector.broadcast %3 : vector<1x128xf32> to vector<16x128xf32>
    %5 = arith.addf %2, %4 : vector<16x128xf32>
    %c0_5 = arith.constant 0 : index
    %c0_6 = arith.constant 0 : index
    %6 = vector.load %arg5[%c0_5, %c0_6] : memref<16x128xf32, #tpu.memory_space<vmem>>, vector<16x128xf32>
    tpu.vector_store %arg5[%c0_5, %c0_6], %5 {strides = array<i32>} : memref<16x128xf32, #tpu.memory_space<vmem>>, vector<16x128xf32>,
    return
  }
  func.func @transform_0(%arg0: i32, %arg1: i32) -> (i32, i32) {
    %c0_i32 = arith.constant 0 : i32
    %c0_i32_0 = arith.constant 0 : i32
    return %arg1, %c0_i32 : i32, i32
  }
  func.func @transform_1(%arg0: i32, %arg1: i32) -> (i32, i32) {
    %c0_i32 = arith.constant 0 : i32
    %c0_i32_0 = arith.constant 0 : i32
    return %arg0, %c0_i32 : i32, i32
  }
  func.func @transform_2(%arg0: i32, %arg1: i32) -> (i32, i32) {
    %c0_i32 = arith.constant 0 : i32
    %c0_i32_0 = arith.constant 0 : i32
    return %c0_i32, %arg0 : i32, i32
  }
  func.func @transform_3(%arg0: i32, %arg1: i32) -> (i32, i32) {
    %c0_i32 = arith.constant 0 : i32
    return %arg1, %arg0 : i32, i32
  }
}

</mosaic_0001>

<llo_original>
// kernel: classif_lin_forward.1
$region0: #{classif_lin_forward.1}
  #allocation0 [shape = 'u32[]', space=smem, size = 0x4, offset = 0x4, fixed_abs, tag = 'smem constant byte address 0x4 - core index']
  #allocation1 [shape = 'u32[144,128]{1,0:T(1,128)}', space=vmem, size = 0x12000, scoped, tag = 'internal scratch']
  %s0 = inlined_call_operand.vmem [shape: f32[16,32], index: 0, kind: input, shape index: {}]
  %s1 = inlined_call_operand.vmem [shape: f32[128,32], index: 1, kind: input, shape index: {}]
  %s2 = inlined_call_operand.vmem [shape: f32[1,128], index: 2, kind: input, shape index: {}]
  %s3 = inlined_call_operand.vmem [shape: f32[16,128], index: 3, kind: output, shape index: {}]
  %s4 = sld [smem:[#allocation0]]
  $region22: #{classif_lin_forward.1} parent=0
    _
  %s6 = ssub.s32 1, %s4
  %s7 = scalar_select 0, %s6, %s4
  // Predicated region
  $region2: #{classif_lin_forward.1} parent=0 // pred_check
    _
  $region3: #{classif_lin_forward.1} parent=0 // pred_check_branch
    %9 = sbr.rel (0) target = $region5
  $region4: #{classif_lin_forward.1} parent=0 // pred_region
    _
  $region5: #{classif_lin_forward.1} parent=0 // pred_fallthru
    _
  // Predicated region
  $region6: #{classif_lin_forward.1} parent=0 // pred_check
    _
  $region7: #{classif_lin_forward.1} parent=0 // pred_check_branch
    %11 = sbr.rel (0) target = $region9
  $region8: #{classif_lin_forward.1} parent=0 // pred_region
    _
  $region9: #{classif_lin_forward.1} parent=0 // pred_fallthru
    _
  // Predicated region
  $region10: #{classif_lin_forward.1} parent=0 // pred_check
    _
  $region11: #{classif_lin_forward.1} parent=0 // pred_check_branch
    %13 = sbr.rel (0) target = $region13
  $region12: #{classif_lin_forward.1} parent=0 // pred_region
    _
  $region13: #{classif_lin_forward.1} parent=0 // pred_fallthru
    _
  %v14 = vld [vmem:[%s0] sm:$0xff]
  %v15 = vld [vmem:[%s0 + $0x8] sm:$0xff]
  %v16 = vld [vmem:[%s1] sm:$0xff]
  %v17 = vld [vmem:[%s1 + $0x8] sm:$0xff]
  %v18 = vld [vmem:[%s1 + $0x10] sm:$0xff]
  %v19 = vld [vmem:[%s1 + $0x18] sm:$0xff]
  %v20 = vld [vmem:[%s1 + $0x20] sm:$0xff]
  %v21 = vld [vmem:[%s1 + $0x28] sm:$0xff]
  %v22 = vld [vmem:[%s1 + $0x30] sm:$0xff]
  %v23 = vld [vmem:[%s1 + $0x38] sm:$0xff]
  %v24 = vld [vmem:[%s1 + $0x40] sm:$0xff]
  %v25 = vld [vmem:[%s1 + $0x48] sm:$0xff]
  %v26 = vld [vmem:[%s1 + $0x50] sm:$0xff]
  %v27 = vld [vmem:[%s1 + $0x58] sm:$0xff]
  %v28 = vld [vmem:[%s1 + $0x60] sm:$0xff]
  %v29 = vld [vmem:[%s1 + $0x68] sm:$0xff]
  %v30 = vld [vmem:[%s1 + $0x70] sm:$0xff]
  %v31 = vld [vmem:[%s1 + $0x78] sm:$0xff]
  %v32 = vld [vmem:[%s2] sm:$0x1]
  %v34 = vlaneseq
  %v35 = vshrl.u32 %v34, 7
  %v36 = vsub.s32 0, %v35
  %v37 = vrot.slane %v32, %v36
  %vm39 = vcmask 261120
  %v41 = vsel %vm39, %v14, 0
  %v44 = vsel %vm39, %v15, 0
  %v47 = vsel %vm39, %v16, 0
  %v50 = vsel %vm39, %v17, 0
  %v53 = vsel %vm39, %v18, 0
  %v56 = vsel %vm39, %v19, 0
  %v59 = vsel %vm39, %v20, 0
  %v62 = vsel %vm39, %v21, 0
  %v65 = vsel %vm39, %v22, 0
  %v68 = vsel %vm39, %v23, 0
  %v71 = vsel %vm39, %v24, 0
  %v74 = vsel %vm39, %v25, 0
  %v77 = vsel %vm39, %v26, 0
  %v80 = vsel %vm39, %v27, 0
  %v83 = vsel %vm39, %v28, 0
  %v86 = vsel %vm39, %v29, 0
  %v89 = vsel %vm39, %v30, 0
  %v92 = vsel %vm39, %v31, 0
  %94 = vmatprep.subr.mxu0 0.0
  %95 = vmatpush1.xpose.msra.mxu0 %v47
  %96 = vmatprep.subr.mxu0 0.0
  %97 = vmatpush1.xpose.msra.mxu0 %v50
  %98 = vmatprep.subr.mxu0 0.0
  %99 = vmatpush1.xpose.msra.mxu0 %v53
  %100 = vmatprep.subr.mxu0 0.0
  %101 = vmatpush1.xpose.msra.mxu0 %v56
  %102 = vmatprep.subr.mxu0 0.0
  %103 = vmatpush1.xpose.msra.mxu0 %v59
  %104 = vmatprep.subr.mxu0 0.0
  %105 = vmatpush1.xpose.msra.mxu0 %v62
  %106 = vmatprep.subr.mxu0 0.0
  %107 = vmatpush1.xpose.msra.mxu0 %v65
  %108 = vmatprep.subr.mxu0 0.0
  %109 = vmatpush1.xpose.msra.mxu0 %v68
  %110 = vmatprep.subr.mxu0 0.0
  %111 = vmatpush1.xpose.msra.mxu0 %v71
  %112 = vmatprep.subr.mxu0 0.0
  %113 = vmatpush1.xpose.msra.mxu0 %v74
  %114 = vmatprep.subr.mxu0 0.0
  %115 = vmatpush1.xpose.msra.mxu0 %v77
  %116 = vmatprep.subr.mxu0 0.0
  %117 = vmatpush1.xpose.msra.mxu0 %v80
  %118 = vmatprep.subr.mxu0 0.0
  %119 = vmatpush1.xpose.msra.mxu0 %v83
  %120 = vmatprep.subr.mxu0 0.0
  %121 = vmatpush1.xpose.msra.mxu0 %v86
  %122 = vmatprep.subr.mxu0 0.0
  %123 = vmatpush1.xpose.msra.mxu0 %v89
  %124 = vmatprep.subr.mxu0 0.0
  %125 = vmatpush1.xpose.msra.mxu0 %v92
  %126 = vmatprep.subr.mxu0 0.0
  %127 = vmatpush1.xpose.msra.mxu0 0.0
  %128 = vmatprep.subr.mxu0 0.0
  %129 = vmatpush1.xpose.msra.mxu0 0.0
  %130 = vmatprep.subr.mxu0 0.0
  %131 = vmatpush1.xpose.msra.mxu0 0.0
  %132 = vmatprep.subr.mxu0 0.0
  %133 = vmatpush1.xpose.msra.mxu0 0.0
  %134 = vmatprep.subr.mxu0 0.0
  %135 = vmatpush1.xpose.msra.mxu0 0.0
  %136 = vmatprep.subr.mxu0 0.0
  %137 = vmatpush1.xpose.msra.mxu0 0.0
  %138 = vmatprep.subr.mxu0 0.0
  %139 = vmatpush1.xpose.msra.mxu0 0.0
  %140 = vmatprep.subr.mxu0 0.0
  %141 = vmatpush1.xpose.msra.mxu0 0.0
  %142 = vmatprep.subr.mxu0 0.0
  %143 = vmatpush1.xpose.msra.mxu0 0.0
  %144 = vmatprep.subr.mxu0 0.0
  %145 = vmatpush1.xpose.msra.mxu0 0.0
  %146 = vmatprep.subr.mxu0 0.0
  %147 = vmatpush1.xpose.msra.mxu0 0.0
  %148 = vmatprep.subr.mxu0 0.0
  %149 = vmatpush1.xpose.msra.mxu0 0.0
  %150 = vmatprep.subr.mxu0 0.0
  %151 = vmatpush1.xpose.msra.mxu0 0.0
  %152 = vmatprep.subr.mxu0 0.0
  %153 = vmatpush1.xpose.msra.mxu0 0.0
  %154 = vmatprep.subr.mxu0 0.0
  %155 = vmatpush1.xpose.msra.mxu0 0.0
  %156 = vmatprep.subr.mxu0 0.0
  %157 = vmatpush1.xpose.msra.mxu0 0.0
  %158 = vmatprep.mubr.f32.mxu0 0.0
  %159 = vmatmul.mubr.f32.gmra.mrb[0].mxu0 %v41
  %v160 = vpop.f32.mrb[0].mxu0
  %v161 = vadd.f32 %v37, %v160
  %v162 = vpop.f32.mrb[0].mxu0
  %163 = vmatprep.mubr.f32.mxu0 0.0
  %164 = vmatmul.mubr.f32.gmra.mrb[0].mxu0 %v44
  %v165 = vpop.f32.mrb[0].mxu0
  %v166 = vadd.f32 %v37, %v165
  %v167 = vpop.f32.mrb[0].mxu0
  %168 = vdwg.mxu0
  %169 = vst [vmem:[%s3] sm:$0xff] %v161
  %170 = vst [vmem:[%s3 + $0x8] sm:$0xff] %v166
  // Predicated region
  $region14: #{classif_lin_forward.1} parent=0 // pred_check
    _
  $region15: #{classif_lin_forward.1} parent=0 // pred_check_branch
    %172 = sbr.rel (0) target = $region17
  $region16: #{classif_lin_forward.1} parent=0 // pred_region
    _
  $region17: #{classif_lin_forward.1} parent=0 // pred_fallthru
    _
  // Predicated region
  $region18: #{classif_lin_forward.1} parent=0 // pred_check
    _
  $region19: #{classif_lin_forward.1} parent=0 // pred_check_branch
    %174 = sbr.rel (0) target = $region21
  $region20: #{classif_lin_forward.1} parent=0 // pred_region
    _
  $region21: #{classif_lin_forward.1} parent=0 // pred_fallthru
    _

</llo_original>
